<compile_context>
chip_gen: v7x
topology: tpu7x:2x2x1
jax: 0.10.0
libtpu: 0.0.40
codegen_flags: <defaults>
</compile_context>

<pallas_src>
import jax
import jax.numpy as jnp
from jax.experimental import pallas as pl
from jax.experimental.pallas import tpu as pltpu

FEATURES = [
    'Delta_Year', 'REAL_SS_MATL', 'GS_THICKNESS', 'REAL2_GS_MATL',
    'TS_THICKNESS', 'REAL_TS_MATL', 'GB_THICKNESS', 'REAL_GB_MATL',
    'TB_THICKNESS', 'REAL_TB_MATL', 'PC_THICKNESS', 'AC_THICKNESS',
    'REAL_AC_MATL', 'REAL_Construction_Type', 'LANE_WIDTH', 'LANE_LENGTH',
    'LANES_NO', 'PRECIPITATION', 'EVAPORATION', 'EMISSIVITY_AVG',
    'SHORTWAVE_SURFACE_AVG', 'REL_HUM_AVG_AVG', 'TEMP_AVG',
    'DAYS_ABOVE_32_C', 'DAYS_BELOW_0_C', 'FREEZE_INDEX', 'FREEZE_THAW',
    'AADT_ALL_VEHIC_2WAY', 'AADT_TRUCK_COMBO_2WAY', 'AADT_ALL_VEHIC',
    'AADT_TRUCK_COMBO', 'ANL_KESAL_LTPP_LN_YR', 'prev_PCI',
]
INIT_DIM = len(FEATURES)   # 33
H1, H2, H3, OUT = 128, 64, 32, 2
BN_EPS = 1e-5
MAX_TILE_B = 8192          # rows per grid step (multiple of 128)


def _round_up(n, m):
    return ((n + m - 1) // m) * m


def _choose_tile_b(B):
    """Tile the batch so (a) >=2 grid steps when possible (v7x megacore),
    (b) tile_b is a multiple of 128 (lane-aligned transposed out block,
    bf16-friendly row count), (c) no block ever exceeds the array extent."""
    tile = _round_up(pl.cdiv(B, 2), 128)
    tile = min(tile, MAX_TILE_B)
    if tile >= B:
        return B            # single full-extent block (no padded rows at all)
    return tile


def interval_model_kernel(
    x_ref,
    w1_ref, b1_ref,
    w2t_ref, b2t_ref,
    w3t_ref, b3t_ref,
    w4t_ref, b4t_ref,
    o_ref,
):
    # Layer 1 (row-major): cast x f32 -> bf16 on the VPU (no wrapper cast pass),
    # BN already folded into w1/b1.  Dropout = identity in eval mode.
    x = x_ref[...].astype(jnp.bfloat16)                       # (tile_b, 33)
    h1 = jnp.dot(x, w1_ref[...],
                 preferred_element_type=jnp.float32) + b1_ref[...]
    h1 = jnp.maximum(h1, 0.0)                                 # (tile_b, 128) f32

    # Switch to feature-major with one tile-aligned f32 transpose (XLU is idle
    # here); everything downstream is lane-dense, ending in an unmasked
    # (OUT, tile_b) output block.
    h1_t = jnp.transpose(h1).astype(jnp.bfloat16)             # (128, tile_b)

    # Layer 2 (BN folded, transposed weights): (64,128)x(128,tile_b)
    h2_t = jnp.dot(w2t_ref[...], h1_t,
                   preferred_element_type=jnp.float32) + b2t_ref[...]
    h2_t = jnp.maximum(h2_t, 0.0)                             # (64, tile_b) f32

    # Layer 3: (32,64)x(64,tile_b)
    h3_t = jnp.dot(w3t_ref[...], h2_t.astype(jnp.bfloat16),
                   preferred_element_type=jnp.float32) + b3t_ref[...]
    h3_t = jnp.maximum(h3_t, 0.0)                             # (32, tile_b) f32

    # Layer 4: (2,32)x(32,tile_b) -> lane-dense (2, tile_b) store.
    o_ref[...] = (jnp.dot(w4t_ref[...], h3_t.astype(jnp.bfloat16),
                          preferred_element_type=jnp.float32)
                  + b4t_ref[...]).astype(o_ref.dtype)


def fold_and_cast_params(p):
    """Fold eval-mode BatchNorm into the preceding Linear, pre-transpose the
    layer-2/3/4 weights & biases for the feature-major tail, cast weights to
    bf16.  Call ONCE and reuse (hoisted out of the forward path)."""
    s1 = p["g1"] * jax.lax.rsqrt(p["v1"] + BN_EPS)            # (1, 128)
    w1 = (p["w1"] * s1).astype(jnp.bfloat16)                  # (33, 128) bf16
    b1 = (p["b1"] - p["m1"]) * s1 + p["be1"]                  # (1, 128) f32

    s2 = p["g2"] * jax.lax.rsqrt(p["v2"] + BN_EPS)            # (1, 64)
    w2t = jnp.transpose(p["w2"] * s2).astype(jnp.bfloat16)    # (64, 128) bf16
    b2t = jnp.transpose((p["b2"] - p["m2"]) * s2 + p["be2"])  # (64, 1) f32

    w3t = jnp.transpose(p["w3"]).astype(jnp.bfloat16)         # (32, 64) bf16
    b3t = jnp.transpose(p["b3"])                              # (32, 1) f32
    w4t = jnp.transpose(p["w4"]).astype(jnp.bfloat16)         # (2, 32) bf16
    b4t = jnp.transpose(p["b4"])                              # (2, 1) f32
    return (w1, b1, w2t, b2t, w3t, b3t, w4t, b4t)


def _vmem_footprint_bytes(tile_b):
    """Lane/sublane-padding-aware (conservative) per-step VMEM estimate."""
    def pad(r, c, itemsize, r_align=8):
        return _round_up(r, r_align) * _round_up(c, 128) * itemsize

    rows = _round_up(tile_b, 16)
    fp = 0
    fp += 2 * pad(rows, INIT_DIM, 4)                 # x f32 block, double-buffered
    fp += pad(rows, INIT_DIM, 2, 16)                 # x bf16 copy
    fp += pad(rows, H1, 4)                           # h1 f32
    fp += pad(H1, rows, 4) + pad(H1, rows, 2, 16)    # h1_t f32 + bf16
    fp += pad(H2, rows, 4) + pad(H2, rows, 2, 16)    # h2_t f32 + bf16
    fp += pad(H3, rows, 4) + pad(H3, rows, 2, 16)    # h3_t f32 + bf16
    fp += 2 * pad(OUT, rows, 4)                      # out block, double-buffered
    # Resident weights/biases.
    fp += pad(INIT_DIM, H1, 2, 16) + pad(1, H1, 4)
    fp += pad(H2, H1, 2, 16) + pad(H2, 1, 4)
    fp += pad(H3, H2, 2, 16) + pad(H3, 1, 4)
    fp += pad(OUT, H3, 2, 16) + pad(OUT, 1, 4)
    return fp


def interval_model_forward(x, folded):
    """x: (B, 33) float32.  folded: output of fold_and_cast_params (reused
    across calls).  Returns (B, 2) float32."""
    B = x.shape[0]
    tile_b = _choose_tile_b(B)
    grid = (pl.cdiv(B, tile_b),)

    def resident(arr):
        # Full-array block, constant index_map -> stays in VMEM across steps.
        return pl.BlockSpec(arr.shape, lambda i: (0, 0))

    in_specs = [pl.BlockSpec((tile_b, INIT_DIM), lambda i: (i, 0))]  # f32 x tile
    in_specs += [resident(a) for a in folded]
    # Lane-dense transposed output: (OUT, tile_b) blocks of an (OUT, B) array.
    out_specs = pl.BlockSpec((OUT, tile_b), lambda i: (0, i))

    weight_bytes = sum(int(a.size) * a.dtype.itemsize for a in folded)
    flops = 2 * B * (INIT_DIM * H1 + H1 * H2 + H2 * H3 + H3 * OUT)
    bytes_accessed = B * INIT_DIM * 4 + B * OUT * 4 + weight_bytes

    footprint = _vmem_footprint_bytes(tile_b)
    vmem_limit = int(min(48 * 1024 * 1024,
                         max(2 * footprint, 32 * 1024 * 1024)))

    out_t = pl.pallas_call(
        interval_model_kernel,
        out_shape=jax.ShapeDtypeStruct((OUT, B), jnp.float32),
        grid=grid,
        in_specs=in_specs,
        out_specs=out_specs,
        compiler_params=pltpu.CompilerParams(
            dimension_semantics=("parallel",),   # v7x: shard batch over 2 TCs
            vmem_limit_bytes=vmem_limit,
        ),
        cost_estimate=pl.CostEstimate(
            flops=flops, transcendentals=0, bytes_accessed=bytes_accessed),
    )(x, *folded)

    return jnp.transpose(out_t)          # tiny (2,B)->(B,2) wrapper transpose


def init_params(key):
    """Deterministic synthetic parameters. Linear weights stored as (in, out)."""
    ks = jax.random.split(key, 16)
    f32 = jnp.float32

    def lin(kw, kb, fan_in, fan_out):
        bound = 1.0 / jnp.sqrt(f32(fan_in))
        w = jax.random.uniform(kw, (fan_in, fan_out), f32, -bound, bound)
        b = jax.random.uniform(kb, (1, fan_out), f32, -bound, bound)
        return w, b

    w1, b1 = lin(ks[0], ks[1], INIT_DIM, H1)
    w2, b2 = lin(ks[2], ks[3], H1, H2)
    w3, b3 = lin(ks[4], ks[5], H2, H3)
    w4, b4 = lin(ks[6], ks[7], H3, OUT)

    def bn(kg, kb, km, kv, dim):
        g = 1.0 + 0.1 * jax.random.normal(kg, (1, dim), f32)
        be = 0.1 * jax.random.normal(kb, (1, dim), f32)
        m = 0.1 * jax.random.normal(km, (1, dim), f32)
        v = 0.5 + jnp.abs(jax.random.normal(kv, (1, dim), f32))
        return g, be, m, v

    g1, be1, m1, v1 = bn(ks[8], ks[9], ks[10], ks[11], H1)
    g2, be2, m2, v2 = bn(ks[12], ks[13], ks[14], ks[15], H2)

    return dict(w1=w1, b1=b1, g1=g1, be1=be1, m1=m1, v1=v1,
                w2=w2, b2=b2, g2=g2, be2=be2, m2=m2, v2=v2,
                w3=w3, b3=b3, w4=w4, b4=b4)


def reference_forward(x, folded):
    """Plain-JAX row-major reference with identical BN folding + bf16 matmul
    inputs and f32 accumulation."""
    w1, b1, w2t, b2t, w3t, b3t, w4t, b4t = folded
    h = jnp.dot(x.astype(jnp.bfloat16), w1,
                preferred_element_type=jnp.float32) + b1
    h = jnp.maximum(h, 0.0)
    h = jnp.dot(h.astype(jnp.bfloat16), w2t.T,
                preferred_element_type=jnp.float32) + b2t.T
    h = jnp.maximum(h, 0.0)
    h = jnp.dot(h.astype(jnp.bfloat16), w3t.T,
                preferred_element_type=jnp.float32) + b3t.T
    h = jnp.maximum(h, 0.0)
    return jnp.dot(h.astype(jnp.bfloat16), w4t.T,
                   preferred_element_type=jnp.float32) + b4t.T


if __name__ == "__main__":
    key = jax.random.PRNGKey(0)
    k_params, k_x = jax.random.split(key)
    params = init_params(k_params)

    # BN fold + weight casts done once, outside the forward path.
    folded = fold_and_cast_params(params)
    folded = jax.tree_util.tree_map(jax.block_until_ready, folded)

    batch = 8
    x = jax.random.normal(k_x, (batch, INIT_DIM), jnp.float32)

    fwd = jax.jit(interval_model_forward)
    out = jax.block_until_ready(fwd(x, folded))

    ref = reference_forward(x, folded)
    assert out.shape == (batch, OUT), out.shape
    max_err = jnp.max(jnp.abs(out - ref))
    assert jnp.allclose(out, ref, atol=2e-2, rtol=2e-2), (
        f"max abs err {max_err}")

    print("KERNEL_OK")
</pallas_src>

<mosaic_0001>
module attributes {stable_mosaic.version = 11 : i64} {
  func.func @interval_model_kernel(%arg0: i32, %arg1: memref<8x33xf32, #tpu.memory_space<vmem>>, %arg2: memref<33x128xbf16, #tpu.memory_space<vmem>>, %arg3: memref<1x128xf32, #tpu.memory_space<vmem>>, %arg4: memref<64x128xbf16, #tpu.memory_space<vmem>>, %arg5: memref<64x1xf32, #tpu.memory_space<vmem>>, %arg6: memref<32x64xbf16, #tpu.memory_space<vmem>>, %arg7: memref<32x1xf32, #tpu.memory_space<vmem>>, %arg8: memref<2x32xbf16, #tpu.memory_space<vmem>>, %arg9: memref<2x1xf32, #tpu.memory_space<vmem>>, %arg10: memref<2x8xf32, #tpu.memory_space<vmem>>) attributes {dimension_semantics = [#tpu.dimension_semantics<parallel>], iteration_bounds = array<i64: 1>, scalar_prefetch = 0 : i64, scratch_operands = 0 : i64, tpu.core_type = #tpu.core_type<tc>, window_params = [{transform_indices = @transform_0, window_bounds = array<i64: 8, 33>}, {pipeline_mode = #tpu.pipeline_mode<synchronous>, transform_indices = @transform_1, window_bounds = array<i64: 33, 128>}, {pipeline_mode = #tpu.pipeline_mode<synchronous>, transform_indices = @transform_2, window_bounds = array<i64: 1, 128>}, {pipeline_mode = #tpu.pipeline_mode<synchronous>, transform_indices = @transform_3, window_bounds = array<i64: 64, 128>}, {pipeline_mode = #tpu.pipeline_mode<synchronous>, transform_indices = @transform_4, window_bounds = array<i64: 64, 1>}, {pipeline_mode = #tpu.pipeline_mode<synchronous>, transform_indices = @transform_5, window_bounds = array<i64: 32, 64>}, {pipeline_mode = #tpu.pipeline_mode<synchronous>, transform_indices = @transform_6, window_bounds = array<i64: 32, 1>}, {pipeline_mode = #tpu.pipeline_mode<synchronous>, transform_indices = @transform_7, window_bounds = array<i64: 2, 32>}, {pipeline_mode = #tpu.pipeline_mode<synchronous>, transform_indices = @transform_8, window_bounds = array<i64: 2, 1>}, {transform_indices = @transform_9, window_bounds = array<i64: 2, 8>}]} {
    %c0 = arith.constant 0 : index
    %c0_0 = arith.constant 0 : index
    %0 = vector.load %arg1[%c0, %c0_0] : memref<8x33xf32, #tpu.memory_space<vmem>>, vector<8x33xf32>
    %1 = arith.truncf %0 : vector<8x33xf32> to vector<8x33xbf16>
    %c0_1 = arith.constant 0 : index
    %c0_2 = arith.constant 0 : index
    %2 = vector.load %arg2[%c0_1, %c0_2] : memref<33x128xbf16, #tpu.memory_space<vmem>>, vector<33x128xbf16>
    %cst = arith.constant dense<0.000000e+00> : vector<8x128xf32>
    %3 = tpu.matmul %1, %2, %cst {dimension_numbers = #tpu.dot_dimension_numbers<[1], [0], [0], [1], [0, 0, 1, 1], [], []>} : vector<8x33xbf16>, vector<33x128xbf16>, vector<8x128xf32> -> vector<8x128xf32>
    %c0_3 = arith.constant 0 : index
    %c0_4 = arith.constant 0 : index
    %4 = vector.load %arg3[%c0_3, %c0_4] : memref<1x128xf32, #tpu.memory_space<vmem>>, vector<1x128xf32>
    %5 = vector.broadcast %4 : vector<1x128xf32> to vector<8x128xf32>
    %6 = arith.addf %3, %5 : vector<8x128xf32>
    %cst_5 = arith.constant 0.000000e+00 : f32
    %7 = vector.broadcast %cst_5 : f32 to vector<8x128xf32>
    %8 = arith.maximumf %6, %7 : vector<8x128xf32>
    %9 = tpu.transpose %8, [1, 0] : vector<8x128xf32> -> vector<128x8xf32>
    %10 = arith.truncf %9 : vector<128x8xf32> to vector<128x8xbf16>
    %c0_6 = arith.constant 0 : index
    %c0_7 = arith.constant 0 : index
    %11 = vector.load %arg4[%c0_6, %c0_7] : memref<64x128xbf16, #tpu.memory_space<vmem>>, vector<64x128xbf16>
    %cst_8 = arith.constant dense<0.000000e+00> : vector<64x8xf32>
    %12 = tpu.matmul %11, %10, %cst_8 {dimension_numbers = #tpu.dot_dimension_numbers<[1], [0], [0], [1], [0, 0, 1, 1], [], []>} : vector<64x128xbf16>, vector<128x8xbf16>, vector<64x8xf32> -> vector<64x8xf32>
    %c0_9 = arith.constant 0 : index
    %c0_10 = arith.constant 0 : index
    %13 = vector.load %arg5[%c0_9, %c0_10] : memref<64x1xf32, #tpu.memory_space<vmem>>, vector<64x1xf32>
    %14 = vector.broadcast %13 : vector<64x1xf32> to vector<64x8xf32>
    %15 = arith.addf %12, %14 : vector<64x8xf32>
    %cst_11 = arith.constant 0.000000e+00 : f32
    %16 = vector.broadcast %cst_11 : f32 to vector<64x8xf32>
    %17 = arith.maximumf %15, %16 : vector<64x8xf32>
    %c0_12 = arith.constant 0 : index
    %c0_13 = arith.constant 0 : index
    %18 = vector.load %arg6[%c0_12, %c0_13] : memref<32x64xbf16, #tpu.memory_space<vmem>>, vector<32x64xbf16>
    %19 = arith.truncf %17 : vector<64x8xf32> to vector<64x8xbf16>
    %cst_14 = arith.constant dense<0.000000e+00> : vector<32x8xf32>
    %20 = tpu.matmul %18, %19, %cst_14 {dimension_numbers = #tpu.dot_dimension_numbers<[1], [0], [0], [1], [0, 0, 1, 1], [], []>} : vector<32x64xbf16>, vector<64x8xbf16>, vector<32x8xf32> -> vector<32x8xf32>
    %c0_15 = arith.constant 0 : index
    %c0_16 = arith.constant 0 : index
    %21 = vector.load %arg7[%c0_15, %c0_16] : memref<32x1xf32, #tpu.memory_space<vmem>>, vector<32x1xf32>
    %22 = vector.broadcast %21 : vector<32x1xf32> to vector<32x8xf32>
    %23 = arith.addf %20, %22 : vector<32x8xf32>
    %cst_17 = arith.constant 0.000000e+00 : f32
    %24 = vector.broadcast %cst_17 : f32 to vector<32x8xf32>
    %25 = arith.maximumf %23, %24 : vector<32x8xf32>
    %c0_18 = arith.constant 0 : index
    %c0_19 = arith.constant 0 : index
    %26 = vector.load %arg8[%c0_18, %c0_19] : memref<2x32xbf16, #tpu.memory_space<vmem>>, vector<2x32xbf16>
    %27 = arith.truncf %25 : vector<32x8xf32> to vector<32x8xbf16>
    %cst_20 = arith.constant dense<0.000000e+00> : vector<2x8xf32>
    %28 = tpu.matmul %26, %27, %cst_20 {dimension_numbers = #tpu.dot_dimension_numbers<[1], [0], [0], [1], [0, 0, 1, 1], [], []>} : vector<2x32xbf16>, vector<32x8xbf16>, vector<2x8xf32> -> vector<2x8xf32>
    %c0_21 = arith.constant 0 : index
    %c0_22 = arith.constant 0 : index
    %29 = vector.load %arg9[%c0_21, %c0_22] : memref<2x1xf32, #tpu.memory_space<vmem>>, vector<2x1xf32>
    %30 = vector.broadcast %29 : vector<2x1xf32> to vector<2x8xf32>
    %31 = arith.addf %28, %30 : vector<2x8xf32>
    %c0_23 = arith.constant 0 : index
    %c0_24 = arith.constant 0 : index
    %32 = vector.load %arg10[%c0_23, %c0_24] : memref<2x8xf32, #tpu.memory_space<vmem>>, vector<2x8xf32>
    tpu.vector_store %arg10[%c0_23, %c0_24], %31 {strides = array<i32>} : memref<2x8xf32, #tpu.memory_space<vmem>>, vector<2x8xf32>,
    return
  }
  func.func @transform_0(%arg0: i32) -> (i32, i32) {
    %c0_i32 = arith.constant 0 : i32
    %c0_i32_0 = arith.constant 0 : i32
    return %arg0, %c0_i32 : i32, i32
  }
  func.func @transform_1(%arg0: i32) -> (i32, i32) {
    %c0_i32 = arith.constant 0 : i32
    %c0_i32_0 = arith.constant 0 : i32
    %c0_i32_1 = arith.constant 0 : i32
    return %c0_i32, %c0_i32_0 : i32, i32
  }
  func.func @transform_2(%arg0: i32) -> (i32, i32) {
    %c0_i32 = arith.constant 0 : i32
    %c0_i32_0 = arith.constant 0 : i32
    %c0_i32_1 = arith.constant 0 : i32
    return %c0_i32, %c0_i32_0 : i32, i32
  }
  func.func @transform_3(%arg0: i32) -> (i32, i32) {
    %c0_i32 = arith.constant 0 : i32
    %c0_i32_0 = arith.constant 0 : i32
    %c0_i32_1 = arith.constant 0 : i32
    return %c0_i32, %c0_i32_0 : i32, i32
  }
  func.func @transform_4(%arg0: i32) -> (i32, i32) {
    %c0_i32 = arith.constant 0 : i32
    %c0_i32_0 = arith.constant 0 : i32
    %c0_i32_1 = arith.constant 0 : i32
    return %c0_i32, %c0_i32_0 : i32, i32
  }
  func.func @transform_5(%arg0: i32) -> (i32, i32) {
    %c0_i32 = arith.constant 0 : i32
    %c0_i32_0 = arith.constant 0 : i32
    %c0_i32_1 = arith.constant 0 : i32
    return %c0_i32, %c0_i32_0 : i32, i32
  }
  func.func @transform_6(%arg0: i32) -> (i32, i32) {
    %c0_i32 = arith.constant 0 : i32
    %c0_i32_0 = arith.constant 0 : i32
    %c0_i32_1 = arith.constant 0 : i32
    return %c0_i32, %c0_i32_0 : i32, i32
  }
  func.func @transform_7(%arg0: i32) -> (i32, i32) {
    %c0_i32 = arith.constant 0 : i32
    %c0_i32_0 = arith.constant 0 : i32
    %c0_i32_1 = arith.constant 0 : i32
    return %c0_i32, %c0_i32_0 : i32, i32
  }
  func.func @transform_8(%arg0: i32) -> (i32, i32) {
    %c0_i32 = arith.constant 0 : i32
    %c0_i32_0 = arith.constant 0 : i32
    %c0_i32_1 = arith.constant 0 : i32
    return %c0_i32, %c0_i32_0 : i32, i32
  }
  func.func @transform_9(%arg0: i32) -> (i32, i32) {
    %c0_i32 = arith.constant 0 : i32
    %c0_i32_0 = arith.constant 0 : i32
    return %c0_i32, %arg0 : i32, i32
  }
}

</mosaic_0001>

<llo_original>
// kernel: interval_model_forward.1
$region0: #{interval_model_forward.1}
  #allocation0 [shape = 'u32[]', space=smem, size = 0x4, offset = 0x4, fixed_abs, tag = 'smem constant byte address 0x4 - core index']
  #allocation1 [shape = 'u32[144,128]{1,0:T(1,128)}', space=vmem, size = 0x12000, scoped, tag = 'internal scratch']
  %s0 = inlined_call_operand.vmem [shape: f32[8,33], index: 0, kind: input, shape index: {}]
  %s1 = inlined_call_operand.vmem [shape: bf16[33,128], index: 1, kind: input, shape index: {}]
  %s2 = inlined_call_operand.vmem [shape: f32[1,128], index: 2, kind: input, shape index: {}]
  %s3 = inlined_call_operand.vmem [shape: bf16[64,128], index: 3, kind: input, shape index: {}]
  %s4 = inlined_call_operand.vmem [shape: f32[64,1], index: 4, kind: input, shape index: {}]
  %s5 = inlined_call_operand.vmem [shape: bf16[32,64], index: 5, kind: input, shape index: {}]
  %s6 = inlined_call_operand.vmem [shape: f32[32,1], index: 6, kind: input, shape index: {}]
  %s7 = inlined_call_operand.vmem [shape: bf16[2,32], index: 7, kind: input, shape index: {}]
  %s8 = inlined_call_operand.vmem [shape: f32[2,1], index: 8, kind: input, shape index: {}]
  %s9 = inlined_call_operand.hbm [shape: f32[2,8], index: 9, kind: output, shape index: {}]
  %s10 = sld [smem:[#allocation0]]
  $region46: #{interval_model_forward.1} parent=0
    _
  %s12 = ssub.s32 1, %s10
  %s13 = scalar_select 0, %s12, %s10
  $region1: #{interval_model_forward.1} parent=0
    #allocation2 [shape = 'u8[1024]{0}', space=vmem, size = 0x400, scoped, tag = 'output window, operand 0, single buffered']
    #allocation3 [shape = 's32[1]{0}', space=sflag, size = 0x4, scoped, tag = 'scoped memory for interval_model_forward.1']
    %14 = vsyncpa [#allocation3], 0
    // Predicated region
    $region2: #{interval_model_forward.1} parent=1 // pred_check
      _
    $region3: #{interval_model_forward.1} parent=1 // pred_check_branch
      %16 = sbr.rel (0) target = $region5
    $region4: #{interval_model_forward.1} parent=1 // pred_region
      _
    $region5: #{interval_model_forward.1} parent=1 // pred_fallthru
      _
    // Predicated region
    $region6: #{interval_model_forward.1} parent=1 // pred_check
      _
    $region7: #{interval_model_forward.1} parent=1 // pred_check_branch
      %18 = sbr.rel (0) target = $region9
    $region8: #{interval_model_forward.1} parent=1 // pred_region
      _
    $region9: #{interval_model_forward.1} parent=1 // pred_fallthru
      _
    // Predicated region
    $region10: #{interval_model_forward.1} parent=1 // pred_check
      _
    $region11: #{interval_model_forward.1} parent=1 // pred_check_branch
      %20 = sbr.rel (0) target = $region13
    $region12: #{interval_model_forward.1} parent=1 // pred_region
      _
    $region13: #{interval_model_forward.1} parent=1 // pred_fallthru
      _
    // Predicated region
    $region14: #{interval_model_forward.1} parent=1 // pred_check
      _
    $region15: #{interval_model_forward.1} parent=1 // pred_check_branch
      %22 = sbr.rel (0) target = $region17
    $region16: #{interval_model_forward.1} parent=1 // pred_region
      _
    $region17: #{interval_model_forward.1} parent=1 // pred_fallthru
      _
    // Predicated region
    $region18: #{interval_model_forward.1} parent=1 // pred_check
      _
    $region19: #{interval_model_forward.1} parent=1 // pred_check_branch
      %24 = sbr.rel (0) target = $region21
    $region20: #{interval_model_forward.1} parent=1 // pred_region
      _
    $region21: #{interval_model_forward.1} parent=1 // pred_fallthru
      _
    // Predicated region
    $region22: #{interval_model_forward.1} parent=1 // pred_check
      _
    $region23: #{interval_model_forward.1} parent=1 // pred_check_branch
      %26 = sbr.rel (0) target = $region25
    $region24: #{interval_model_forward.1} parent=1 // pred_region
      _
    $region25: #{interval_model_forward.1} parent=1 // pred_fallthru
      _
    // Predicated region
    $region26: #{interval_model_forward.1} parent=1 // pred_check
      _
    $region27: #{interval_model_forward.1} parent=1 // pred_check_branch
      %28 = sbr.rel (0) target = $region29
    $region28: #{interval_model_forward.1} parent=1 // pred_region
      _
    $region29: #{interval_model_forward.1} parent=1 // pred_fallthru
      _
    // Predicated region
    $region30: #{interval_model_forward.1} parent=1 // pred_check
      _
    $region31: #{interval_model_forward.1} parent=1 // pred_check_branch
      %30 = sbr.rel (0) target = $region33
    $region32: #{interval_model_forward.1} parent=1 // pred_region
      _
    $region33: #{interval_model_forward.1} parent=1 // pred_fallthru
      _
    // Predicated region
    $region34: #{interval_model_forward.1} parent=1 // pred_check
      _
    $region35: #{interval_model_forward.1} parent=1 // pred_check_branch
      %32 = sbr.rel (0) target = $region37
    $region36: #{interval_model_forward.1} parent=1 // pred_region
      _
    $region37: #{interval_model_forward.1} parent=1 // pred_fallthru
      _
    %v34 = vld [vmem:[%s0] sm:$0xff]
    %v35 = vpack.c.bf16 %v34, %v34
    %v36 = vld [vmem:[%s1] sm:$0xf]
    %v37 = vld [vmem:[%s1 + $0x4] sm:$0xf]
    %v38 = vld [vmem:[%s1 + $0x8] sm:$0xf]
    %v39 = vld [vmem:[%s1 + $0xc] sm:$0xf]
    %v40 = vld [vmem:[%s1 + $0x10] sm:$0x1]
    %v41 = vld [vmem:[%s2] sm:$0x1]
    %v43 = vlaneseq
    %v44 = vshrl.u32 %v43, 7
    %v45 = vsub.s32 0, %v44
    %v46 = vrot.slane %v41, %v45
    %v53 = vunpack.c.l.b16 %v36
    %v54 = vunpack.c.l.b16 %v37
    %v55 = vunpack.c.l.b16 %v38
    %v56 = vunpack.c.l.b16 %v39
    %v57 = vunpack.c.l.b16 %v40
    %v58 = vpack.c.b16 %v54, %v53
    %v59 = vpack.c.b16 %v56, %v55
    %v60 = vpack.c.b16 %v57, %v57
    %vm63 = vcmask 269312
    %v65 = vsel %vm63, %v35, 0
    %vm67 = vcmask 1040384
    %v68 = vsel 0, 4294967295, 65535
    %v69 = vsel %vm67, %v68, 0
    %v71 = vand.u32 %v60, %v69
    %73 = vmatprep.subr.bf16.mxu0 0
    %74 = vmatpush1.bf16.msra.mxu0 %v58
    %75 = vmatprep.subr.bf16.mxu0 0
    %76 = vmatpush1.bf16.msra.mxu0 %v59
    %77 = vmatprep.subr.bf16.mxu0 0
    %78 = vmatpush1.bf16.msra.mxu0 %v71
    %79 = vmatprep.subr.bf16.mxu0 0
    %80 = vmatpush1.bf16.msra.mxu0 0
    %81 = vmatprep.subr.bf16.mxu0 0
    %82 = vmatpush1.bf16.msra.mxu0 0
    %83 = vmatprep.subr.bf16.mxu0 0
    %84 = vmatpush1.bf16.msra.mxu0 0
    %85 = vmatprep.subr.bf16.mxu0 0
    %86 = vmatpush1.bf16.msra.mxu0 0
    %87 = vmatprep.subr.bf16.mxu0 0
    %88 = vmatpush1.bf16.msra.mxu0 0
    %89 = vmatprep.subr.bf16.mxu0 0
    %90 = vmatpush1.bf16.msra.mxu0 0
    %91 = vmatprep.subr.bf16.mxu0 0
    %92 = vmatpush1.bf16.msra.mxu0 0
    %93 = vmatprep.subr.bf16.mxu0 0
    %94 = vmatpush1.bf16.msra.mxu0 0
    %95 = vmatprep.subr.bf16.mxu0 0
    %96 = vmatpush1.bf16.msra.mxu0 0
    %97 = vmatprep.subr.bf16.mxu0 0
    %98 = vmatpush1.bf16.msra.mxu0 0
    %99 = vmatprep.subr.bf16.mxu0 0
    %100 = vmatpush1.bf16.msra.mxu0 0
    %101 = vmatprep.subr.bf16.mxu0 0
    %102 = vmatpush1.bf16.msra.mxu0 0
    %103 = vmatprep.subr.bf16.mxu0 0
    %104 = vmatpush1.bf16.msra.mxu0 0
    %105 = vmatprep.mubr.bf16.mxu0 0
    %106 = vmatmul.mubr.bf16.gmra.mrb[0].mxu0 %v65
    %v107 = vpop.f32.mrb[0].mxu0
    %v108 = vadd.f32 %v46, %v107
    %v109 = vpop.f32.mrb[0].mxu0
    %v110 = vpop.f32.mrb[0].mxu0
    %v111 = vpop.f32.mrb[0].mxu0
    %112 = vdwg.mxu0
    %v113 = vmax.f32 %v108, 0.0
    %114 = vxpose.xlu0.b32.start [1/16] %v113, 128
    %115 = vxpose.xlu0.b32.cont [2/16] 0.0, 128
    %116 = vxpose.xlu0.b32.cont [3/16] 0.0, 128
    %117 = vxpose.xlu0.b32.cont [4/16] 0.0, 128
    %118 = vxpose.xlu0.b32.cont [5/16] 0.0, 128
    %119 = vxpose.xlu0.b32.cont [6/16] 0.0, 128
    %120 = vxpose.xlu0.b32.cont [7/16] 0.0, 128
    %121 = vxpose.xlu0.b32.cont [8/16] 0.0, 128
    %122 = vxpose.xlu0.b32.cont [9/16] 0.0, 128
    %123 = vxpose.xlu0.b32.cont [10/16] 0.0, 128
    %124 = vxpose.xlu0.b32.cont [11/16] 0.0, 128
    %125 = vxpose.xlu0.b32.cont [12/16] 0.0, 128
    %126 = vxpose.xlu0.b32.cont [13/16] 0.0, 128
    %127 = vxpose.xlu0.b32.cont [14/16] 0.0, 128
    %128 = vxpose.xlu0.b32.cont [15/16] 0.0, 128
    %129 = vxpose.xlu0.b32.end [16/16] 0.0, 128
    %v130 = vpop.trf.xlu0
    %v131 = vpop.trf.xlu0
    %v132 = vpop.trf.xlu0
    %v133 = vpop.trf.xlu0
    %v134 = vpop.trf.xlu0
    %v135 = vpop.trf.xlu0
    %v136 = vpop.trf.xlu0
    %v137 = vpop.trf.xlu0
    %v138 = vpop.trf.xlu0
    %v139 = vpop.trf.xlu0
    %v140 = vpop.trf.xlu0
    %v141 = vpop.trf.xlu0
    %v142 = vpop.trf.xlu0
    %v143 = vpop.trf.xlu0
    %v144 = vpop.trf.xlu0
    %v145 = vpop.trf.xlu0
    %v146 = vpack.c.bf16 %v131, %v130
    %v147 = vpack.c.bf16 %v133, %v132
    %v148 = vpack.c.bf16 %v135, %v134
    %v149 = vpack.c.bf16 %v137, %v136
    %v150 = vpack.c.bf16 %v139, %v138
    %v151 = vpack.c.bf16 %v141, %v140
    %v152 = vpack.c.bf16 %v143, %v142
    %v153 = vpack.c.bf16 %v145, %v144
    %v154 = vld [vmem:[%s3] sm:$0xf]
    %v155 = vld [vmem:[%s3 + $0x4] sm:$0xf]
    %v156 = vld [vmem:[%s3 + $0x8] sm:$0xf]
    %v157 = vld [vmem:[%s3 + $0xc] sm:$0xf]
    %v158 = vld [vmem:[%s3 + $0x10] sm:$0xf]
    %v159 = vld [vmem:[%s3 + $0x14] sm:$0xf]
    %v160 = vld [vmem:[%s3 + $0x18] sm:$0xf]
    %v161 = vld [vmem:[%s3 + $0x1c] sm:$0xf]
    %v162 = vld [vmem:[%s4] sm:$0xff]
    %v163 = vld [vmem:[%s4 + $0x8] sm:$0xff]
    %v164 = vld [vmem:[%s4 + $0x10] sm:$0xff]
    %v165 = vld [vmem:[%s4 + $0x18] sm:$0xff]
    %v166 = vld [vmem:[%s4 + $0x20] sm:$0xff]
    %v167 = vld [vmem:[%s4 + $0x28] sm:$0xff]
    %v168 = vld [vmem:[%s4 + $0x30] sm:$0xff]
    %v169 = vld [vmem:[%s4 + $0x38] sm:$0xff]
    %171 = vset.pattern.permute.xlu0 0
    %172 = vperm.xlu0 %171, %v162
    %v173 = vpop.permute.xlu0 %172
    %176 = vset.pattern.permute.xlu0 0
    %177 = vperm.xlu0 %176, %v163
    %v178 = vpop.permute.xlu0 %177
    %181 = vset.pattern.permute.xlu0 0
    %182 = vperm.xlu0 %181, %v164
    %v183 = vpop.permute.xlu0 %182
    %186 = vset.pattern.permute.xlu0 0
    %187 = vperm.xlu0 %186, %v165
    %v188 = vpop.permute.xlu0 %187
    %191 = vset.pattern.permute.xlu0 0
    %192 = vperm.xlu0 %191, %v166
    %v193 = vpop.permute.xlu0 %192
    %196 = vset.pattern.permute.xlu0 0
    %197 = vperm.xlu0 %196, %v167
    %v198 = vpop.permute.xlu0 %197
    %201 = vset.pattern.permute.xlu0 0
    %202 = vperm.xlu0 %201, %v168
    %v203 = vpop.permute.xlu0 %202
    %206 = vset.pattern.permute.xlu0 0
    %207 = vperm.xlu0 %206, %v169
    %v208 = vpop.permute.xlu0 %207
    %v218 = vunpack.c.l.b16 %v154
    %v219 = vunpack.c.l.b16 %v155
    %v220 = vunpack.c.l.b16 %v156
    %v221 = vunpack.c.l.b16 %v157
    %v222 = vunpack.c.l.b16 %v158
    %v223 = vunpack.c.l.b16 %v159
    %v224 = vunpack.c.l.b16 %v160
    %v225 = vunpack.c.l.b16 %v161
    %v226 = vpack.c.b16 %v219, %v218
    %v227 = vpack.c.b16 %v221, %v220
    %v228 = vpack.c.b16 %v223, %v222
    %v229 = vpack.c.b16 %v225, %v224
    %234 = vmatprep.subr.bf16.mxu0 0
    %235 = vmatpush1.bf16.msra.mxu0 %v146
    %236 = vmatprep.subr.bf16.mxu0 0
    %237 = vmatpush1.bf16.msra.mxu0 %v147
    %238 = vmatprep.subr.bf16.mxu0 0
    %239 = vmatpush1.bf16.msra.mxu0 %v148
    %240 = vmatprep.subr.bf16.mxu0 0
    %241 = vmatpush1.bf16.msra.mxu0 %v149
    %242 = vmatprep.subr.bf16.mxu0 0
    %243 = vmatpush1.bf16.msra.mxu0 %v150
    %244 = vmatprep.subr.bf16.mxu0 0
    %245 = vmatpush1.bf16.msra.mxu0 %v151
    %246 = vmatprep.subr.bf16.mxu0 0
    %247 = vmatpush1.bf16.msra.mxu0 %v152
    %248 = vmatprep.subr.bf16.mxu0 0
    %249 = vmatpush1.bf16.msra.mxu0 %v153
    %250 = vmatprep.subr.bf16.mxu0 0
    %251 = vmatpush1.bf16.msra.mxu0 0
    %252 = vmatprep.subr.bf16.mxu0 0
    %253 = vmatpush1.bf16.msra.mxu0 0
    %254 = vmatprep.subr.bf16.mxu0 0
    %255 = vmatpush1.bf16.msra.mxu0 0
    %256 = vmatprep.subr.bf16.mxu0 0
    %257 = vmatpush1.bf16.msra.mxu0 0
    %258 = vmatprep.subr.bf16.mxu0 0
    %259 = vmatpush1.bf16.msra.mxu0 0
    %260 = vmatprep.subr.bf16.mxu0 0
    %261 = vmatpush1.bf16.msra.mxu0 0
    %262 = vmatprep.subr.bf16.mxu0 0
    %263 = vmatpush1.bf16.msra.mxu0 0
    %264 = vmatprep.subr.bf16.mxu0 0
    %265 = vmatpush1.bf16.msra.mxu0 0
    %266 = vmatprep.mubr.bf16.mxu0 0
    %267 = vmatmul.mubr.bf16.gmra.mrb[0].mxu0 %v226
    %v268 = vpop.f32.mrb[0].mxu0
    %v269 = vadd.f32 %v173, %v268
    %v270 = vpop.f32.mrb[0].mxu0
    %v271 = vpop.f32.mrb[0].mxu0
    %v272 = vadd.f32 %v178, %v271
    %v273 = vpop.f32.mrb[0].mxu0
    %274 = vmatprep.mubr.bf16.mxu0 0
    %275 = vmatmul.mubr.bf16.gmra.mrb[0].mxu0 %v227
    %v276 = vpop.f32.mrb[0].mxu0
    %v277 = vadd.f32 %v183, %v276
    %v278 = vpop.f32.mrb[0].mxu0
    %v279 = vpop.f32.mrb[0].mxu0
    %v280 = vadd.f32 %v188, %v279
    %v281 = vpop.f32.mrb[0].mxu0
    %282 = vmatprep.mubr.bf16.mxu0 0
    %283 = vmatmul.mubr.bf16.gmra.mrb[0].mxu0 %v228
    %v284 = vpop.f32.mrb[0].mxu0
    %v285 = vadd.f32 %v193, %v284
    %v286 = vpop.f32.mrb[0].mxu0
    %v287 = vpop.f32.mrb[0].mxu0
    %v288 = vadd.f32 %v198, %v287
    %v289 = vpop.f32.mrb[0].mxu0
    %290 = vmatprep.mubr.bf16.mxu0 0
    %291 = vmatmul.mubr.bf16.gmra.mrb[0].mxu0 %v229
    %v292 = vpop.f32.mrb[0].mxu0
    %v293 = vadd.f32 %v203, %v292
    %v294 = vpop.f32.mrb[0].mxu0
    %v295 = vpop.f32.mrb[0].mxu0
    %v296 = vadd.f32 %v208, %v295
    %v297 = vpop.f32.mrb[0].mxu0
    %298 = vdwg.mxu0
    %v299 = vmax.f32 %v269, 0.0
    %v300 = vmax.f32 %v272, 0.0
    %v301 = vmax.f32 %v277, 0.0
    %v302 = vmax.f32 %v280, 0.0
    %v303 = vmax.f32 %v285, 0.0
    %v304 = vmax.f32 %v288, 0.0
    %v305 = vmax.f32 %v293, 0.0
    %v306 = vmax.f32 %v296, 0.0
    %v307 = vld [vmem:[%s5] sm:$0xf]
    %v308 = vld [vmem:[%s5 + $0x4] sm:$0xf]
    %v309 = vld [vmem:[%s5 + $0x8] sm:$0xf]
    %v310 = vld [vmem:[%s5 + $0xc] sm:$0xf]
    %v311 = vpack.c.bf16 %v300, %v299
    %v312 = vpack.c.bf16 %v302, %v301
    %v313 = vpack.c.bf16 %v304, %v303
    %v314 = vpack.c.bf16 %v306, %v305
    %v315 = vld [vmem:[%s6] sm:$0xff]
    %v316 = vld [vmem:[%s6 + $0x8] sm:$0xff]
    %v317 = vld [vmem:[%s6 + $0x10] sm:$0xff]
    %v318 = vld [vmem:[%s6 + $0x18] sm:$0xff]
    %320 = vset.pattern.permute.xlu0 0
    %321 = vperm.xlu0 %320, %v315
    %v322 = vpop.permute.xlu0 %321
    %325 = vset.pattern.permute.xlu0 0
    %326 = vperm.xlu0 %325, %v316
    %v327 = vpop.permute.xlu0 %326
    %330 = vset.pattern.permute.xlu0 0
    %331 = vperm.xlu0 %330, %v317
    %v332 = vpop.permute.xlu0 %331
    %335 = vset.pattern.permute.xlu0 0
    %336 = vperm.xlu0 %335, %v318
    %v337 = vpop.permute.xlu0 %336
    %v343 = vunpack.c.l.b16 %v307
    %v344 = vunpack.c.l.b16 %v308
    %v345 = vunpack.c.l.b16 %v309
    %v346 = vunpack.c.l.b16 %v310
    %v347 = vpack.c.b16 %v344, %v343
    %v348 = vpack.c.b16 %v346, %v345
    %vm349 = vcmask 523264
    %v351 = vsel %vm349, %v347, 0
    %v354 = vsel %vm349, %v348, 0
    %356 = vmatprep.subr.bf16.mxu0 0
    %357 = vmatpush1.bf16.msra.mxu0 %v311
    %358 = vmatprep.subr.bf16.mxu0 0
    %359 = vmatpush1.bf16.msra.mxu0 %v312
    %360 = vmatprep.subr.bf16.mxu0 0
    %361 = vmatpush1.bf16.msra.mxu0 %v313
    %362 = vmatprep.subr.bf16.mxu0 0
    %363 = vmatpush1.bf16.msra.mxu0 %v314
    %364 = vmatprep.subr.bf16.mxu0 0
    %365 = vmatpush1.bf16.msra.mxu0 0
    %366 = vmatprep.subr.bf16.mxu0 0
    %367 = vmatpush1.bf16.msra.mxu0 0
    %368 = vmatprep.subr.bf16.mxu0 0
    %369 = vmatpush1.bf16.msra.mxu0 0
    %370 = vmatprep.subr.bf16.mxu0 0
    %371 = vmatpush1.bf16.msra.mxu0 0
    %372 = vmatprep.subr.bf16.mxu0 0
    %373 = vmatpush1.bf16.msra.mxu0 0
    %374 = vmatprep.subr.bf16.mxu0 0
    %375 = vmatpush1.bf16.msra.mxu0 0
    %376 = vmatprep.subr.bf16.mxu0 0
    %377 = vmatpush1.bf16.msra.mxu0 0
    %378 = vmatprep.subr.bf16.mxu0 0
    %379 = vmatpush1.bf16.msra.mxu0 0
    %380 = vmatprep.subr.bf16.mxu0 0
    %381 = vmatpush1.bf16.msra.mxu0 0
    %382 = vmatprep.subr.bf16.mxu0 0
    %383 = vmatpush1.bf16.msra.mxu0 0
    %384 = vmatprep.subr.bf16.mxu0 0
    %385 = vmatpush1.bf16.msra.mxu0 0
    %386 = vmatprep.subr.bf16.mxu0 0
    %387 = vmatpush1.bf16.msra.mxu0 0
    %388 = vmatprep.mubr.bf16.mxu0 0
    %389 = vmatmul.mubr.bf16.gmra.mrb[0].mxu0 %v351
    %v390 = vpop.f32.mrb[0].mxu0
    %v391 = vadd.f32 %v322, %v390
    %v392 = vpop.f32.mrb[0].mxu0
    %v393 = vpop.f32.mrb[0].mxu0
    %v394 = vadd.f32 %v327, %v393
    %v395 = vpop.f32.mrb[0].mxu0
    %396 = vmatprep.mubr.bf16.mxu0 0
    %397 = vmatmul.mubr.bf16.gmra.mrb[0].mxu0 %v354
    %v398 = vpop.f32.mrb[0].mxu0
    %v399 = vadd.f32 %v332, %v398
    %v400 = vpop.f32.mrb[0].mxu0
    %v401 = vpop.f32.mrb[0].mxu0
    %v402 = vadd.f32 %v337, %v401
    %v403 = vpop.f32.mrb[0].mxu0
    %404 = vdwg.mxu0
    %v405 = vmax.f32 %v391, 0.0
    %v406 = vmax.f32 %v394, 0.0
    %v407 = vmax.f32 %v399, 0.0
    %v408 = vmax.f32 %v402, 0.0
    %v409 = vld [vmem:[%s7] sm:$0x1]
    %v410 = vpack.c.bf16 %v406, %v405
    %v411 = vpack.c.bf16 %v408, %v407
    %v412 = vld [vmem:[%s8] sm:$0x3]
    %414 = vset.pattern.permute.xlu0 0
    %415 = vperm.xlu0 %414, %v412
    %v416 = vpop.permute.xlu0 %415
    %vm418 = vcmask 261120
    %v420 = vsel %vm418, %v409, 0
    %422 = vmatprep.subr.bf16.mxu0 0
    %423 = vmatpush1.bf16.msra.mxu0 %v410
    %424 = vmatprep.subr.bf16.mxu0 0
    %425 = vmatpush1.bf16.msra.mxu0 %v411
    %426 = vmatprep.subr.bf16.mxu0 0
    %427 = vmatpush1.bf16.msra.mxu0 0
    %428 = vmatprep.subr.bf16.mxu0 0
    %429 = vmatpush1.bf16.msra.mxu0 0
    %430 = vmatprep.subr.bf16.mxu0 0
    %431 = vmatpush1.bf16.msra.mxu0 0
    %432 = vmatprep.subr.bf16.mxu0 0
    %433 = vmatpush1.bf16.msra.mxu0 0
    %434 = vmatprep.subr.bf16.mxu0 0
    %435 = vmatpush1.bf16.msra.mxu0 0
    %436 = vmatprep.subr.bf16.mxu0 0
    %437 = vmatpush1.bf16.msra.mxu0 0
    %438 = vmatprep.subr.bf16.mxu0 0
    %439 = vmatpush1.bf16.msra.mxu0 0
    %440 = vmatprep.subr.bf16.mxu0 0
    %441 = vmatpush1.bf16.msra.mxu0 0
    %442 = vmatprep.subr.bf16.mxu0 0
    %443 = vmatpush1.bf16.msra.mxu0 0
    %444 = vmatprep.subr.bf16.mxu0 0
    %445 = vmatpush1.bf16.msra.mxu0 0
    %446 = vmatprep.subr.bf16.mxu0 0
    %447 = vmatpush1.bf16.msra.mxu0 0
    %448 = vmatprep.subr.bf16.mxu0 0
    %449 = vmatpush1.bf16.msra.mxu0 0
    %450 = vmatprep.subr.bf16.mxu0 0
    %451 = vmatpush1.bf16.msra.mxu0 0
    %452 = vmatprep.subr.bf16.mxu0 0
    %453 = vmatpush1.bf16.msra.mxu0 0
    %454 = vmatprep.mubr.bf16.mxu0 0
    %455 = vmatmul.mubr.bf16.gmra.mrb[0].mxu0 %v420
    %v456 = vpop.f32.mrb[0].mxu0
    %v457 = vadd.f32 %v416, %v456
    %v458 = vpop.f32.mrb[0].mxu0
    %v459 = vpop.f32.mrb[0].mxu0
    %v460 = vpop.f32.mrb[0].mxu0
    %461 = vdwg.mxu0
    %vm462 = vcmask 58368
    %463 = vst.msk [vmem:[#allocation2] sm:$0x3] %vm462, %v457
    // Predicated region
    $region38: #{interval_model_forward.1} parent=1 // pred_check
      _
    $region39: #{interval_model_forward.1} parent=1 // pred_check_branch
      %465 = sbr.rel (0) target = $region41
    $region40: #{interval_model_forward.1} parent=1 // pred_region
      %s467 = ssub.s32 32, 32
      %468 = vsyncadd [#allocation3], %s467
      %s470 = sshll.u32 [#allocation2], 4
      %s471 = int_to_ptr.vmem [resolvable:$true] %s470
      %473 = dma.vmem_to_hbm [thread:$0]  %s471, 32, %s9, [#allocation3]
    $region41: #{interval_model_forward.1} parent=1 // pred_fallthru
      _
    // Predicated region
    $region42: #{interval_model_forward.1} parent=1 // pred_check
      _
    $region43: #{interval_model_forward.1} parent=1 // pred_check_branch
      %475 = sbr.rel (0) target = $region45
    $region44: #{interval_model_forward.1} parent=1 // pred_region
      %476 = dma.done [#allocation3], 32
    $region45: #{interval_model_forward.1} parent=1 // pred_fallthru
      _
    %477 = vsyncpa [#allocation3], 1

</llo_original>
